<compile_context>
chip_gen: v6e
topology: v6e:2x2x1
jax: 0.10.0
libtpu: 0.0.40
codegen_flags: <defaults>
</compile_context>

<pallas_src>
import math
from functools import partial

import jax
import jax.numpy as jnp
import numpy as np
from jax.experimental import pallas as pl
from jax.experimental.pallas import tpu as pltpu

# ----------------------------- configuration ---------------------------------
EMB_DIM = 32           # emb_dim
REL_OUT_DIM = 32       # args.relation_output_dim
NUM_CLASSES = 4        # args.classes  -> C+1 = 5
TYPE_DIM = 8           # args.type_dim
POS_DIM = 8            # args.pos_dim
NUM_ENTITIES = 10      # args.num_entities
NUM_BUCKETS = 8        # args.num_buckets
REL_HIDDEN = 64        # args.relation_hidden_dims = [64]
SC_HIDDEN = 32         # args.shouldcopy_hidden_dims = [32]
C1 = NUM_CLASSES + 1
FEAT_DIM = 2 * EMB_DIM + 2 * TYPE_DIM + POS_DIM   # 88
LOG99 = math.log(0.99)
LOGSMOOTH = math.log(0.01 / C1)

# Weight-slab row offsets. Every start is a multiple of 8 so the static ref views used in the
# kernel stay sublane-tile aligned.
_R_RW1, _R_RB1 = 0, 88          # rel_w1 (88,64), rel_b1 (1,64)
_R_RW2, _R_RB2 = 96, 160        # rel_w2 (64,32), rel_b2 (1,32)
_R_MW1, _R_MB1 = 168, 200       # mc_w1 (32,64),  mc_b1 (1,64)
_R_MW2, _R_MB2 = 208, 272       # mc_w2 (64,5),   mc_b2 (1,5)
_R_SW1, _R_SB1 = 280, 344       # sc_w1 (64,32),  sc_b1 (1,32)
_R_SW2, _R_SB2 = 352, 384       # sc_w2 (32,1),   sc_b2 (1,1)
_SLAB_ROWS, _SLAB_COLS = 392, 128

# NOTE: with attnmethod='dotprod' the AttentionDist.label_embedding / MLP network are unused
# in forward, so they are not materialized here.
# TODO(synk): use_prototype=True path (torch.unique / np.setdiff1d -> data-dependent shapes)
# has no clean static-shape Pallas equivalent; configured use_prototype=False.
# TODO(synk): the context=None / copy-only early-return branches are data-dependent control
# flow outside the kernel; only the copy+generate path is implemented.


def _stable_logaddexp(a, b):
    mx = jnp.maximum(a, b)
    return mx + jnp.log(jnp.exp(a - mx) + jnp.exp(b - mx))


# --------------------------- single fused kernel ------------------------------
def _fused_kernel(feats_ref, lab_ref, gate_ref, w_ref, out_ref, *, B, Nq, Nc):
    f32 = jnp.float32
    NQ, NC = B * Nq, B * Nc

    # ---- parameter views out of the packed slab (static, sublane-aligned slices) ----
    rel_w1 = w_ref[_R_RW1:_R_RW1 + FEAT_DIM, 0:REL_HIDDEN]
    rel_b1 = w_ref[_R_RB1:_R_RB1 + 1, 0:REL_HIDDEN]
    rel_w2 = w_ref[_R_RW2:_R_RW2 + REL_HIDDEN, 0:REL_OUT_DIM]
    rel_b2 = w_ref[_R_RB2:_R_RB2 + 1, 0:REL_OUT_DIM]
    mc_w1 = w_ref[_R_MW1:_R_MW1 + REL_OUT_DIM, 0:REL_HIDDEN]
    mc_b1 = w_ref[_R_MB1:_R_MB1 + 1, 0:REL_HIDDEN]
    mc_w2 = w_ref[_R_MW2:_R_MW2 + REL_HIDDEN, 0:C1]
    mc_b2 = w_ref[_R_MB2:_R_MB2 + 1, 0:C1]
    sc_w1q = w_ref[_R_SW1:_R_SW1 + REL_OUT_DIM, 0:SC_HIDDEN]            # query half of sc_w1
    sc_w1c = w_ref[_R_SW1 + REL_OUT_DIM:_R_SW1 + 2 * REL_OUT_DIM, 0:SC_HIDDEN]  # ctx half
    sc_b1 = w_ref[_R_SB1:_R_SB1 + 1, 0:SC_HIDDEN]
    sc_w2 = w_ref[_R_SW2:_R_SW2 + SC_HIDDEN, 0:1]
    sc_b2 = w_ref[_R_SB2:_R_SB2 + 1, 0:1]

    # ---- RelationEmbedding MLP over queries + contexts in ONE pass ----
    feats = feats_ref[...]                                              # (NQ+NC, 88)
    h = jnp.maximum(jnp.dot(feats, rel_w1, preferred_element_type=f32) + rel_b1, 0.0)
    emb = jnp.dot(h, rel_w2, preferred_element_type=f32) + rel_b2       # (NQ+NC, 32)
    q_emb = emb[0:NQ, :]                                                # (NQ, 32) aligned
    c_emb = emb[NQ:NQ + NC, :]                                          # (NC, 32) aligned

    # ---- generate branch: MultiClass MLP + log_softmax (all query rows at once) ----
    g = jnp.maximum(jnp.dot(q_emb, mc_w1, preferred_element_type=f32) + mc_b1, 0.0)
    g = jnp.dot(g, mc_w2, preferred_element_type=f32) + mc_b2           # (NQ, C1)
    gmx = jnp.max(g, axis=-1, keepdims=True)
    gen = g - (gmx + jnp.log(jnp.sum(jnp.exp(g - gmx), axis=-1, keepdims=True)))

    # ---- block-diagonal dot-product attention across all batches at once ----
    # gate: within-batch -> multiplicative mask value (module semantics: logits * mask);
    #       cross-batch  -> -1 sentinel, turned into a -1e30 additive bias here.
    scores = jax.lax.dot_general(q_emb, c_emb, (((1,), (1,)), ((), ())),
                                 preferred_element_type=f32)            # (NQ, NC)
    gate = gate_ref[...]
    attn = scores * jnp.maximum(gate, 0.0) + jnp.minimum(gate, 0.0) * 1e30
    mx = jnp.max(attn, axis=-1, keepdims=True)
    ex = jnp.exp(attn - mx)                                             # cross-batch -> 0
    denom = jnp.sum(ex, axis=-1, keepdims=True)
    p = ex * pl.reciprocal(denom, approx=True)                          # softmax (EUP slot)
    ctx_vec = jnp.dot(p, c_emb, preferred_element_type=f32)             # (NQ, 32)

    # per-class logsumexp of log-softmax == log(softmax @ onehot); any -inf from classes with
    # zero attention mass is erased by the 0.99/0.01 smoothing below.
    onehot = (lab_ref[...] ==
              jax.lax.broadcasted_iota(jnp.int32, (NC, C1), 1)).astype(f32)
    lc = jnp.log(jnp.dot(ex, onehot, preferred_element_type=f32)) - jnp.log(denom)
    copy_dist = _stable_logaddexp(lc + LOG99, jnp.full_like(lc, LOGSMOOTH))

    # ---- ShouldCopy gate (concat avoided by row-splitting sc_w1), batched over all rows ----
    hsc = jnp.maximum(jnp.dot(q_emb, sc_w1q, preferred_element_type=f32)
                      + jnp.dot(ctx_vec, sc_w1c, preferred_element_type=f32) + sc_b1, 0.0)
    sc = jnp.dot(hsc, sc_w2, preferred_element_type=f32) + sc_b2        # (NQ, 1)
    copy_lp = -_stable_logaddexp(jnp.zeros_like(sc), -sc)               # logsigmoid(sc)
    gen_lp = -_stable_logaddexp(jnp.zeros_like(sc), sc)                 # logsigmoid(-sc)

    final = _stable_logaddexp(copy_lp + copy_dist, gen_lp + gen)        # (NQ, C1)
    # single merged output: [final(5) | copy_lp | gen_lp | sc_logit]  -> one wider store
    out_ref[...] = jnp.concatenate([final, copy_lp, gen_lp, sc], axis=-1)


def _full_spec(shape):
    nd = len(shape)
    return pl.BlockSpec(shape, lambda i, _nd=nd: (0,) * _nd)


# ------------------------------ parameter packing ------------------------------
def pack_weight_slab(params):
    """Pack all 12 MLP weight/bias arrays into one lane-padded f32 slab (single DMA).
    Done once outside jit; the slab is reused across forward calls."""
    slab = jnp.zeros((_SLAB_ROWS, _SLAB_COLS), jnp.float32)

    def put(s, row, arr):
        return jax.lax.dynamic_update_slice(s, arr.astype(jnp.float32), (row, 0))

    slab = put(slab, _R_RW1, params["rel_w1"]); slab = put(slab, _R_RB1, params["rel_b1"])
    slab = put(slab, _R_RW2, params["rel_w2"]); slab = put(slab, _R_RB2, params["rel_b2"])
    slab = put(slab, _R_MW1, params["mc_w1"]);  slab = put(slab, _R_MB1, params["mc_b1"])
    slab = put(slab, _R_MW2, params["mc_w2"]);  slab = put(slab, _R_MB2, params["mc_b2"])
    slab = put(slab, _R_SW1, params["sc_w1"]);  slab = put(slab, _R_SB1, params["sc_b1"])
    slab = put(slab, _R_SW2, params["sc_w2"]);  slab = put(slab, _R_SB2, params["sc_b2"])
    return slab


# ------------------------------- model wrapper --------------------------------
@jax.jit
def copy_editor_forward(weight_slab, type_emb, pos_emb,
                        query_vectors, context_vectors, context_labels, mask):
    (q_head, q_htype), (q_tail, q_ttype), q_pos = query_vectors
    (c_head, c_htype), (c_tail, c_ttype), c_pos = context_vectors
    B, Nq, _ = q_head.shape
    _, Nc, _ = c_head.shape

    # Tiny embedding-table gathers + feature concat stay in XLA (layout plumbing);
    # everything compute-heavy runs inside the single fused kernel.
    def feat_slab(head, tail, htype, ttype, pos):
        return jnp.concatenate(
            [head.reshape(-1, EMB_DIM), tail.reshape(-1, EMB_DIM),
             jnp.take(type_emb, htype.reshape(-1), axis=0),
             jnp.take(type_emb, ttype.reshape(-1), axis=0),
             jnp.take(pos_emb, pos.reshape(-1), axis=0)], axis=-1)

    feats = jnp.concatenate(
        [feat_slab(q_head, q_tail, q_htype, q_ttype, q_pos),     # (B*Nq, 88)
         feat_slab(c_head, c_tail, c_htype, c_ttype, c_pos)],    # (B*Nc, 88)
        axis=0)

    labels = context_labels.reshape(B * Nc, 1).astype(jnp.int32)

    # gate[i, j]: mask value for within-batch pairs, -1 sentinel for cross-batch pairs.
    mask_flat = mask.reshape(1, B * Nc).astype(jnp.float32)
    row_b = jnp.repeat(jnp.arange(B), Nq)[:, None]
    col_b = jnp.repeat(jnp.arange(B), Nc)[None, :]
    gate = jnp.where(row_b == col_b,
                     jnp.broadcast_to(mask_flat, (B * Nq, B * Nc)),
                     -1.0).astype(jnp.float32)

    out = pl.pallas_call(
        partial(_fused_kernel, B=B, Nq=Nq, Nc=Nc),
        out_shape=jax.ShapeDtypeStruct((B * Nq, 8), jnp.float32),
        grid=(1,),
        in_specs=[_full_spec(feats.shape), _full_spec(labels.shape),
                  _full_spec(gate.shape), _full_spec(weight_slab.shape)],
        out_specs=_full_spec((B * Nq, 8)),
        compiler_params=pltpu.CompilerParams(dimension_semantics=("arbitrary",)),
    )(feats, labels, gate, weight_slab)

    final = out[:, 0:C1].reshape(B, Nq, C1)
    copy_lp = out[:, C1:C1 + 1].reshape(B, Nq, 1)
    return final, copy_lp


# ----------------------------- pure-JAX reference -----------------------------
def reference_forward(params, query_vectors, context_vectors, context_labels, mask):
    def mlp_ref(x, w1, b1, w2, b2):
        h = jnp.maximum(x @ w1 + b1, 0.0)
        return h @ w2 + b2

    def rel_ref(head, tail, ht, tt, pos):
        B, N, _ = head.shape
        feats = jnp.concatenate(
            [head.reshape(-1, EMB_DIM), tail.reshape(-1, EMB_DIM),
             params["type_emb"][ht.reshape(-1)], params["type_emb"][tt.reshape(-1)],
             params["pos_emb"][pos.reshape(-1)]], axis=-1)
        return mlp_ref(feats, params["rel_w1"], params["rel_b1"],
                       params["rel_w2"], params["rel_b2"]).reshape(B, N, REL_OUT_DIM)

    (qh, qht), (qt, qtt), qp = query_vectors
    (ch, cht), (ct, ctt), cp = context_vectors
    qe = rel_ref(qh, qt, qht, qtt, qp)
    ce = rel_ref(ch, ct, cht, ctt, cp)
    B, Nq, _ = qe.shape

    gen = jax.nn.log_softmax(
        mlp_ref(qe.reshape(-1, REL_OUT_DIM), params["mc_w1"], params["mc_b1"],
                params["mc_w2"], params["mc_b2"]), axis=-1).reshape(B, Nq, C1)

    attn = jnp.sum(qe[:, :, None, :] * ce[:, None, :, :], axis=-1) * mask[:, None, :]
    lsm = jax.nn.log_softmax(attn, axis=-1)
    ctx_vec = jnp.sum(jnp.exp(lsm)[..., None] * ce[:, None, :, :], axis=2)
    onehot = jax.nn.one_hot(context_labels, C1)                     # (B,Nc,C1)
    masked = jnp.where(onehot[:, None, :, :] > 0, lsm[..., None], -jnp.inf)
    lsm_classes = jax.scipy.special.logsumexp(masked, axis=2)       # (B,Nq,C1)

    copy_dist = jnp.logaddexp(lsm_classes + LOG99,
                              jnp.full_like(lsm_classes, LOGSMOOTH))
    sc_logit = mlp_ref(jnp.concatenate([qe, ctx_vec], -1).reshape(-1, 2 * REL_OUT_DIM),
                       params["sc_w1"], params["sc_b1"],
                       params["sc_w2"], params["sc_b2"]).reshape(B, Nq)
    copy_lp = jax.nn.log_sigmoid(sc_logit)[..., None]
    gen_lp = jax.nn.log_sigmoid(-sc_logit)[..., None]
    final = jnp.logaddexp(copy_lp + copy_dist, gen_lp + gen)
    return final, copy_lp


# ------------------------------- parameter init --------------------------------
def init_params(key):
    ks = jax.random.split(key, 8)

    def lin(k, fin, fout):
        kw, kb = jax.random.split(k)
        w = jax.random.normal(kw, (fin, fout), jnp.float32) / jnp.sqrt(jnp.float32(fin))
        b = jax.random.normal(kb, (1, fout), jnp.float32) * 0.01
        return w, b

    rel_in = 2 * EMB_DIM + 2 * TYPE_DIM + POS_DIM
    p = {}
    p["rel_w1"], p["rel_b1"] = lin(ks[0], rel_in, REL_HIDDEN)
    p["rel_w2"], p["rel_b2"] = lin(ks[1], REL_HIDDEN, REL_OUT_DIM)
    p["mc_w1"], p["mc_b1"] = lin(ks[2], REL_OUT_DIM, REL_HIDDEN)
    p["mc_w2"], p["mc_b2"] = lin(ks[3], REL_HIDDEN, C1)
    p["sc_w1"], p["sc_b1"] = lin(ks[4], 2 * REL_OUT_DIM, SC_HIDDEN)
    p["sc_w2"], p["sc_b2"] = lin(ks[5], SC_HIDDEN, 1)
    p["type_emb"] = jax.random.normal(ks[6], (NUM_ENTITIES, TYPE_DIM), jnp.float32) * 0.1
    p["pos_emb"] = jax.random.normal(ks[7], (NUM_BUCKETS, POS_DIM), jnp.float32) * 0.1
    return p


if __name__ == "__main__":
    key = jax.random.PRNGKey(0)
    pkey, dkey = jax.random.split(key)
    params = init_params(pkey)
    weight_slab = jax.block_until_ready(pack_weight_slab(params))   # packed once, reused

    B, Nq, Nc = 2, 8, 6
    ks = jax.random.split(dkey, 11)
    q_head = jax.random.normal(ks[0], (B, Nq, EMB_DIM), jnp.float32)
    q_tail = jax.random.normal(ks[1], (B, Nq, EMB_DIM), jnp.float32)
    q_htype = jax.random.randint(ks[2], (1, B * Nq), 0, NUM_ENTITIES)
    q_ttype = jax.random.randint(ks[3], (1, B * Nq), 0, NUM_ENTITIES)
    q_pos = jax.random.randint(ks[4], (1, B * Nq), 0, NUM_BUCKETS)
    c_head = jax.random.normal(ks[5], (B, Nc, EMB_DIM), jnp.float32)
    c_tail = jax.random.normal(ks[6], (B, Nc, EMB_DIM), jnp.float32)
    c_htype = jax.random.randint(ks[7], (1, B * Nc), 0, NUM_ENTITIES)
    c_ttype = jax.random.randint(ks[8], (1, B * Nc), 0, NUM_ENTITIES)
    c_pos = jax.random.randint(ks[9], (1, B * Nc), 0, NUM_BUCKETS)
    ctx_labels = jax.random.randint(ks[10], (B, Nc), 0, C1)
    mask = jnp.ones((B, Nc), jnp.float32).at[1, -1].set(0.0)

    query_vectors = ((q_head, q_htype), (q_tail, q_ttype), q_pos)
    context_vectors = ((c_head, c_htype), (c_tail, c_ttype), c_pos)

    final_probs, copy_prob = copy_editor_forward(
        weight_slab, params["type_emb"], params["pos_emb"],
        query_vectors, context_vectors, ctx_labels, mask)
    jax.block_until_ready(final_probs)
    jax.block_until_ready(copy_prob)

    ref_final, ref_copy = reference_forward(
        params, query_vectors, context_vectors, ctx_labels, mask)

    assert final_probs.shape == (B, Nq, C1)
    assert copy_prob.shape == (B, Nq, 1)
    np.testing.assert_allclose(np.asarray(final_probs), np.asarray(ref_final),
                               rtol=2e-2, atol=2e-2)
    np.testing.assert_allclose(np.asarray(copy_prob), np.asarray(ref_copy),
                               rtol=2e-2, atol=2e-2)
    print("KERNEL_OK")
</pallas_src>

<mosaic_0001>
module attributes {stable_mosaic.version = 11 : i64} {
  func.func @_fused_kernel(%arg0: i32, %arg1: memref<28x88xf32, #tpu.memory_space<vmem>>, %arg2: memref<12x1xi32, #tpu.memory_space<vmem>>, %arg3: memref<16x12xf32, #tpu.memory_space<vmem>>, %arg4: memref<392x128xf32, #tpu.memory_space<vmem>>, %arg5: memref<16x8xf32, #tpu.memory_space<vmem>>) attributes {dimension_semantics = [#tpu.dimension_semantics<arbitrary>], iteration_bounds = array<i64: 1>, scalar_prefetch = 0 : i64, scratch_operands = 0 : i64, tpu.core_type = #tpu.core_type<tc>, window_params = [{pipeline_mode = #tpu.pipeline_mode<synchronous>, transform_indices = @transform_0, window_bounds = array<i64: 28, 88>}, {pipeline_mode = #tpu.pipeline_mode<synchronous>, transform_indices = @transform_1, window_bounds = array<i64: 12, 1>}, {pipeline_mode = #tpu.pipeline_mode<synchronous>, transform_indices = @transform_2, window_bounds = array<i64: 16, 12>}, {pipeline_mode = #tpu.pipeline_mode<synchronous>, transform_indices = @transform_3, window_bounds = array<i64: 392, 128>}, {pipeline_mode = #tpu.pipeline_mode<synchronous>, transform_indices = @transform_4, window_bounds = array<i64: 16, 8>}]} {
    %c0 = arith.constant 0 : index
    %c0_0 = arith.constant 0 : index
    %0 = vector.load %arg4[%c0, %c0_0] : memref<392x128xf32, #tpu.memory_space<vmem>>, vector<88x64xf32>
    %c88 = arith.constant 88 : index
    %c0_1 = arith.constant 0 : index
    %1 = vector.load %arg4[%c88, %c0_1] : memref<392x128xf32, #tpu.memory_space<vmem>>, vector<1x64xf32>
    %c96 = arith.constant 96 : index
    %c0_2 = arith.constant 0 : index
    %2 = vector.load %arg4[%c96, %c0_2] : memref<392x128xf32, #tpu.memory_space<vmem>>, vector<64x32xf32>
    %c160 = arith.constant 160 : index
    %c0_3 = arith.constant 0 : index
    %3 = vector.load %arg4[%c160, %c0_3] : memref<392x128xf32, #tpu.memory_space<vmem>>, vector<1x32xf32>
    %c168 = arith.constant 168 : index
    %c0_4 = arith.constant 0 : index
    %4 = vector.load %arg4[%c168, %c0_4] : memref<392x128xf32, #tpu.memory_space<vmem>>, vector<32x64xf32>
    %c200 = arith.constant 200 : index
    %c0_5 = arith.constant 0 : index
    %5 = vector.load %arg4[%c200, %c0_5] : memref<392x128xf32, #tpu.memory_space<vmem>>, vector<1x64xf32>
    %c208 = arith.constant 208 : index
    %c0_6 = arith.constant 0 : index
    %6 = vector.load %arg4[%c208, %c0_6] : memref<392x128xf32, #tpu.memory_space<vmem>>, vector<64x5xf32>
    %c272 = arith.constant 272 : index
    %c0_7 = arith.constant 0 : index
    %7 = vector.load %arg4[%c272, %c0_7] : memref<392x128xf32, #tpu.memory_space<vmem>>, vector<1x5xf32>
    %c280 = arith.constant 280 : index
    %c0_8 = arith.constant 0 : index
    %8 = vector.load %arg4[%c280, %c0_8] : memref<392x128xf32, #tpu.memory_space<vmem>>, vector<32x32xf32>
    %c312 = arith.constant 312 : index
    %c0_9 = arith.constant 0 : index
    %9 = vector.load %arg4[%c312, %c0_9] : memref<392x128xf32, #tpu.memory_space<vmem>>, vector<32x32xf32>
    %c344 = arith.constant 344 : index
    %c0_10 = arith.constant 0 : index
    %10 = vector.load %arg4[%c344, %c0_10] : memref<392x128xf32, #tpu.memory_space<vmem>>, vector<1x32xf32>
    %c352 = arith.constant 352 : index
    %c0_11 = arith.constant 0 : index
    %11 = vector.load %arg4[%c352, %c0_11] : memref<392x128xf32, #tpu.memory_space<vmem>>, vector<32x1xf32>
    %c384 = arith.constant 384 : index
    %c0_12 = arith.constant 0 : index
    %12 = vector.load %arg4[%c384, %c0_12] : memref<392x128xf32, #tpu.memory_space<vmem>>, vector<1x1xf32>
    %c0_13 = arith.constant 0 : index
    %c0_14 = arith.constant 0 : index
    %13 = vector.load %arg1[%c0_13, %c0_14] : memref<28x88xf32, #tpu.memory_space<vmem>>, vector<28x88xf32>
    %cst = arith.constant dense<0.000000e+00> : vector<28x64xf32>
    %14 = tpu.matmul %13, %0, %cst {dimension_numbers = #tpu.dot_dimension_numbers<[1], [0], [0], [1], [0, 0, 1, 1], [], []>} : vector<28x88xf32>, vector<88x64xf32>, vector<28x64xf32> -> vector<28x64xf32>
    %15 = vector.broadcast %1 : vector<1x64xf32> to vector<28x64xf32>
    %16 = arith.addf %14, %15 : vector<28x64xf32>
    %cst_15 = arith.constant 0.000000e+00 : f32
    %17 = vector.broadcast %cst_15 : f32 to vector<28x64xf32>
    %18 = arith.maximumf %16, %17 : vector<28x64xf32>
    %cst_16 = arith.constant dense<0.000000e+00> : vector<28x32xf32>
    %19 = tpu.matmul %18, %2, %cst_16 {dimension_numbers = #tpu.dot_dimension_numbers<[1], [0], [0], [1], [0, 0, 1, 1], [], []>} : vector<28x64xf32>, vector<64x32xf32>, vector<28x32xf32> -> vector<28x32xf32>
    %20 = vector.broadcast %3 : vector<1x32xf32> to vector<28x32xf32>
    %21 = arith.addf %19, %20 : vector<28x32xf32>
    %22 = vector.extract_strided_slice %21 {offsets = [0, 0], sizes = [16, 32], strides = [1, 1]} : vector<28x32xf32> to vector<16x32xf32>
    %23 = vector.extract_strided_slice %21 {offsets = [16, 0], sizes = [12, 32], strides = [1, 1]} : vector<28x32xf32> to vector<12x32xf32>
    %cst_17 = arith.constant dense<0.000000e+00> : vector<16x64xf32>
    %24 = tpu.matmul %22, %4, %cst_17 {dimension_numbers = #tpu.dot_dimension_numbers<[1], [0], [0], [1], [0, 0, 1, 1], [], []>} : vector<16x32xf32>, vector<32x64xf32>, vector<16x64xf32> -> vector<16x64xf32>
    %25 = vector.broadcast %5 : vector<1x64xf32> to vector<16x64xf32>
    %26 = arith.addf %24, %25 : vector<16x64xf32>
    %cst_18 = arith.constant 0.000000e+00 : f32
    %27 = vector.broadcast %cst_18 : f32 to vector<16x64xf32>
    %28 = arith.maximumf %26, %27 : vector<16x64xf32>
    %cst_19 = arith.constant dense<0.000000e+00> : vector<16x5xf32>
    %29 = tpu.matmul %28, %6, %cst_19 {dimension_numbers = #tpu.dot_dimension_numbers<[1], [0], [0], [1], [0, 0, 1, 1], [], []>} : vector<16x64xf32>, vector<64x5xf32>, vector<16x5xf32> -> vector<16x5xf32>
    %30 = vector.broadcast %7 : vector<1x5xf32> to vector<16x5xf32>
    %31 = arith.addf %29, %30 : vector<16x5xf32>
    %cst_20 = arith.constant dense<0xFF800000> : vector<16xf32>
    %32 = vector.multi_reduction <maximumf>, %31, %cst_20 [1] : vector<16x5xf32> to vector<16xf32>
    %33 = vector.shape_cast %32 : vector<16xf32> to vector<16x1xf32>
    %34 = vector.broadcast %33 : vector<16x1xf32> to vector<16x5xf32>
    %35 = arith.subf %31, %34 : vector<16x5xf32>
    %36 = math.exp %35 : vector<16x5xf32>
    %cst_21 = arith.constant dense<0.000000e+00> : vector<16xf32>
    %37 = vector.multi_reduction <add>, %36, %cst_21 [1] : vector<16x5xf32> to vector<16xf32>
    %38 = vector.shape_cast %37 : vector<16xf32> to vector<16x1xf32>
    %39 = math.log %38 : vector<16x1xf32>
    %40 = arith.addf %33, %39 : vector<16x1xf32>
    %41 = vector.broadcast %40 : vector<16x1xf32> to vector<16x5xf32>
    %42 = arith.subf %31, %41 : vector<16x5xf32>
    %cst_22 = arith.constant dense<0.000000e+00> : vector<16x12xf32>
    %43 = tpu.matmul %22, %23, %cst_22 {dimension_numbers = #tpu.dot_dimension_numbers<[1], [1], [0], [0], [0, 0, 1, 0], [], []>} : vector<16x32xf32>, vector<12x32xf32>, vector<16x12xf32> -> vector<16x12xf32>
    %c0_23 = arith.constant 0 : index
    %c0_24 = arith.constant 0 : index
    %44 = vector.load %arg3[%c0_23, %c0_24] : memref<16x12xf32, #tpu.memory_space<vmem>>, vector<16x12xf32>
    %cst_25 = arith.constant 0.000000e+00 : f32
    %45 = vector.broadcast %cst_25 : f32 to vector<16x12xf32>
    %46 = arith.maximumf %44, %45 : vector<16x12xf32>
    %47 = arith.mulf %43, %46 : vector<16x12xf32>
    %cst_26 = arith.constant 0.000000e+00 : f32
    %48 = vector.broadcast %cst_26 : f32 to vector<16x12xf32>
    %49 = arith.minimumf %44, %48 : vector<16x12xf32>
    %cst_27 = arith.constant 1.000000e+30 : f32
    %50 = vector.broadcast %cst_27 : f32 to vector<16x12xf32>
    %51 = arith.mulf %49, %50 : vector<16x12xf32>
    %52 = arith.addf %47, %51 : vector<16x12xf32>
    %cst_28 = arith.constant dense<0xFF800000> : vector<16xf32>
    %53 = vector.multi_reduction <maximumf>, %52, %cst_28 [1] : vector<16x12xf32> to vector<16xf32>
    %54 = vector.shape_cast %53 : vector<16xf32> to vector<16x1xf32>
    %55 = vector.broadcast %54 : vector<16x1xf32> to vector<16x12xf32>
    %56 = arith.subf %52, %55 : vector<16x12xf32>
    %57 = math.exp %56 : vector<16x12xf32>
    %cst_29 = arith.constant dense<0.000000e+00> : vector<16xf32>
    %58 = vector.multi_reduction <add>, %57, %cst_29 [1] : vector<16x12xf32> to vector<16xf32>
    %59 = vector.shape_cast %58 : vector<16xf32> to vector<16x1xf32>
    %60 = tpu.reciprocal %59 {approx = true} : vector<16x1xf32> -> vector<16x1xf32>
    %61 = vector.broadcast %60 : vector<16x1xf32> to vector<16x12xf32>
    %62 = arith.mulf %57, %61 : vector<16x12xf32>
    %cst_30 = arith.constant dense<0.000000e+00> : vector<16x32xf32>
    %63 = tpu.matmul %62, %23, %cst_30 {dimension_numbers = #tpu.dot_dimension_numbers<[1], [0], [0], [1], [0, 0, 1, 1], [], []>} : vector<16x12xf32>, vector<12x32xf32>, vector<16x32xf32> -> vector<16x32xf32>
    %c0_31 = arith.constant 0 : index
    %c0_32 = arith.constant 0 : index
    %64 = vector.load %arg2[%c0_31, %c0_32] : memref<12x1xi32, #tpu.memory_space<vmem>>, vector<12x1xi32>
    %65 = tpu.iota {dimensions = array<i32: 1>} : vector<12x5xi32>
    %66 = vector.broadcast %64 : vector<12x1xi32> to vector<12x5xi32>
    %67 = arith.cmpi eq, %66, %65 : vector<12x5xi32>
    %68 = arith.extui %67 : vector<12x5xi1> to vector<12x5xi32>
    %69 = arith.sitofp %68 : vector<12x5xi32> to vector<12x5xf32>
    %cst_33 = arith.constant dense<0.000000e+00> : vector<16x5xf32>
    %70 = tpu.matmul %57, %69, %cst_33 {dimension_numbers = #tpu.dot_dimension_numbers<[1], [0], [0], [1], [0, 0, 1, 1], [], []>} : vector<16x12xf32>, vector<12x5xf32>, vector<16x5xf32> -> vector<16x5xf32>
    %71 = math.log %70 : vector<16x5xf32>
    %72 = math.log %59 : vector<16x1xf32>
    %73 = vector.broadcast %72 : vector<16x1xf32> to vector<16x5xf32>
    %74 = arith.subf %71, %73 : vector<16x5xf32>
    %cst_34 = arith.constant -0.0100503359 : f32
    %75 = vector.broadcast %cst_34 : f32 to vector<16x5xf32>
    %76 = arith.addf %74, %75 : vector<16x5xf32>
    %cst_35 = arith.constant -6.21460819 : f32
    %77 = vector.broadcast %cst_35 : f32 to vector<16x5xf32>
    %78 = arith.maximumf %76, %77 : vector<16x5xf32>
    %79 = arith.subf %76, %78 : vector<16x5xf32>
    %80 = math.exp %79 : vector<16x5xf32>
    %81 = arith.subf %77, %78 : vector<16x5xf32>
    %82 = math.exp %81 : vector<16x5xf32>
    %83 = arith.addf %80, %82 : vector<16x5xf32>
    %84 = math.log %83 : vector<16x5xf32>
    %85 = arith.addf %78, %84 : vector<16x5xf32>
    %cst_36 = arith.constant dense<0.000000e+00> : vector<16x32xf32>
    %86 = tpu.matmul %22, %8, %cst_36 {dimension_numbers = #tpu.dot_dimension_numbers<[1], [0], [0], [1], [0, 0, 1, 1], [], []>} : vector<16x32xf32>, vector<32x32xf32>, vector<16x32xf32> -> vector<16x32xf32>
    %cst_37 = arith.constant dense<0.000000e+00> : vector<16x32xf32>
    %87 = tpu.matmul %63, %9, %cst_37 {dimension_numbers = #tpu.dot_dimension_numbers<[1], [0], [0], [1], [0, 0, 1, 1], [], []>} : vector<16x32xf32>, vector<32x32xf32>, vector<16x32xf32> -> vector<16x32xf32>
    %88 = arith.addf %86, %87 : vector<16x32xf32>
    %89 = vector.broadcast %10 : vector<1x32xf32> to vector<16x32xf32>
    %90 = arith.addf %88, %89 : vector<16x32xf32>
    %cst_38 = arith.constant 0.000000e+00 : f32
    %91 = vector.broadcast %cst_38 : f32 to vector<16x32xf32>
    %92 = arith.maximumf %90, %91 : vector<16x32xf32>
    %cst_39 = arith.constant dense<0.000000e+00> : vector<16x1xf32>
    %93 = tpu.matmul %92, %11, %cst_39 {dimension_numbers = #tpu.dot_dimension_numbers<[1], [0], [0], [1], [0, 0, 1, 1], [], []>} : vector<16x32xf32>, vector<32x1xf32>, vector<16x1xf32> -> vector<16x1xf32>
    %94 = vector.broadcast %12 : vector<1x1xf32> to vector<16x1xf32>
    %95 = arith.addf %93, %94 : vector<16x1xf32>
    %cst_40 = arith.constant 0.000000e+00 : f32
    %96 = vector.broadcast %cst_40 : f32 to vector<16x1xf32>
    %cst_41 = arith.constant 0.000000e+00 : f32
    %97 = vector.broadcast %cst_41 : f32 to vector<16x1xf32>
    %98 = arith.subf %97, %95 : vector<16x1xf32>
    %99 = arith.maximumf %96, %98 : vector<16x1xf32>
    %100 = arith.subf %96, %99 : vector<16x1xf32>
    %101 = math.exp %100 : vector<16x1xf32>
    %102 = arith.subf %98, %99 : vector<16x1xf32>
    %103 = math.exp %102 : vector<16x1xf32>
    %104 = arith.addf %101, %103 : vector<16x1xf32>
    %105 = math.log %104 : vector<16x1xf32>
    %106 = arith.addf %99, %105 : vector<16x1xf32>
    %cst_42 = arith.constant 0.000000e+00 : f32
    %107 = vector.broadcast %cst_42 : f32 to vector<16x1xf32>
    %108 = arith.subf %107, %106 : vector<16x1xf32>
    %cst_43 = arith.constant 0.000000e+00 : f32
    %109 = vector.broadcast %cst_43 : f32 to vector<16x1xf32>
    %110 = arith.maximumf %109, %95 : vector<16x1xf32>
    %111 = arith.subf %109, %110 : vector<16x1xf32>
    %112 = math.exp %111 : vector<16x1xf32>
    %113 = arith.subf %95, %110 : vector<16x1xf32>
    %114 = math.exp %113 : vector<16x1xf32>
    %115 = arith.addf %112, %114 : vector<16x1xf32>
    %116 = math.log %115 : vector<16x1xf32>
    %117 = arith.addf %110, %116 : vector<16x1xf32>
    %cst_44 = arith.constant 0.000000e+00 : f32
    %118 = vector.broadcast %cst_44 : f32 to vector<16x1xf32>
    %119 = arith.subf %118, %117 : vector<16x1xf32>
    %120 = vector.broadcast %108 : vector<16x1xf32> to vector<16x5xf32>
    %121 = arith.addf %120, %85 : vector<16x5xf32>
    %122 = vector.broadcast %119 : vector<16x1xf32> to vector<16x5xf32>
    %123 = arith.addf %122, %42 : vector<16x5xf32>
    %124 = arith.maximumf %121, %123 : vector<16x5xf32>
    %125 = arith.subf %121, %124 : vector<16x5xf32>
    %126 = math.exp %125 : vector<16x5xf32>
    %127 = arith.subf %123, %124 : vector<16x5xf32>
    %128 = math.exp %127 : vector<16x5xf32>
    %129 = arith.addf %126, %128 : vector<16x5xf32>
    %130 = math.log %129 : vector<16x5xf32>
    %131 = arith.addf %124, %130 : vector<16x5xf32>
    %132 = tpu.concatenate %131, %108, %119, %95 in 1 : vector<16x5xf32>, vector<16x1xf32>, vector<16x1xf32>, vector<16x1xf32> -> vector<16x8xf32>
    %c0_45 = arith.constant 0 : index
    %c0_46 = arith.constant 0 : index
    %133 = vector.load %arg5[%c0_45, %c0_46] : memref<16x8xf32, #tpu.memory_space<vmem>>, vector<16x8xf32>
    tpu.vector_store %arg5[%c0_45, %c0_46], %132 {strides = array<i32>} : memref<16x8xf32, #tpu.memory_space<vmem>>, vector<16x8xf32>,
    return
  }
  func.func @transform_0(%arg0: i32) -> (i32, i32) {
    %c0_i32 = arith.constant 0 : i32
    %c0_i32_0 = arith.constant 0 : i32
    %c0_i32_1 = arith.constant 0 : i32
    return %c0_i32, %c0_i32_0 : i32, i32
  }
  func.func @transform_1(%arg0: i32) -> (i32, i32) {
    %c0_i32 = arith.constant 0 : i32
    %c0_i32_0 = arith.constant 0 : i32
    %c0_i32_1 = arith.constant 0 : i32
    return %c0_i32, %c0_i32_0 : i32, i32
  }
  func.func @transform_2(%arg0: i32) -> (i32, i32) {
    %c0_i32 = arith.constant 0 : i32
    %c0_i32_0 = arith.constant 0 : i32
    %c0_i32_1 = arith.constant 0 : i32
    return %c0_i32, %c0_i32_0 : i32, i32
  }
  func.func @transform_3(%arg0: i32) -> (i32, i32) {
    %c0_i32 = arith.constant 0 : i32
    %c0_i32_0 = arith.constant 0 : i32
    %c0_i32_1 = arith.constant 0 : i32
    return %c0_i32, %c0_i32_0 : i32, i32
  }
  func.func @transform_4(%arg0: i32) -> (i32, i32) {
    %c0_i32 = arith.constant 0 : i32
    %c0_i32_0 = arith.constant 0 : i32
    %c0_i32_1 = arith.constant 0 : i32
    return %c0_i32, %c0_i32_0 : i32, i32
  }
}

</mosaic_0001>

<llo_original>
// kernel: eq.11
$region0: #{eq.11}
  %s0 = inlined_call_operand.vmem [shape: s32[2,6], index: 0, kind: input, shape index: {}]
  %s1 = inlined_call_operand.vmem [shape: s32[12], index: 1, kind: output, shape index: {}]
  $region1: #{eq.11} parent=0
    #allocation0 [shape = 'u8[4096]{0}', space=vmem, size = 0x1000, scoped, tag = 'scoped mem for output reshape']
    #allocation1 [shape = 'u8[4096]{0}', space=vmem, size = 0x1000, scoped, tag = 'scoped mem for input reshape']
    %s3 = sshll.u32 1, 2
    %s4 = ssub.s32 %s3, 1
    %v5 = vld [vmem:[%s0] sm:%s4]
    %6 = vst [vmem:[#allocation1] sm:%s4] %v5
    %v7 = vld [vmem:[#allocation1] sm:$0x1]
    %vm8 = vcmask 48128
    %9 = vst.msk [vmem:[#allocation0] sm:$0x1] %vm8, %v7
    %s10 = scalar_lea.vmem [#allocation1], 1
    %v11 = vld [vmem:[%s10] sm:$0x1]
    %12 = vrot.lane.b32.xlu0 %v11, 6
    %v13 = vpop.permute.xlu0 %12
    %vm14 = vcmask 97328
    %15 = vst.msk [vmem:[#allocation0] sm:$0x1] %vm14, %v13
    %s17 = sshll.u32 1, 1
    %s18 = ssub.s32 %s17, 1
    %v20 = vld [vmem:[#allocation0] sm:%s18]
    %s21 = sshll.u32 1, 1
    %s22 = ssub.s32 %s21, 1
    %23 = vst [vmem:[%s1] sm:%s22] %v20

// kernel: eq.8
$region0: #{eq.8}
  %s0 = inlined_call_operand.vmem [shape: s32[2,8], index: 0, kind: input, shape index: {}]
  %s1 = inlined_call_operand.vmem [shape: s32[16], index: 1, kind: output, shape index: {}]
  $region1: #{eq.8} parent=0
    #allocation0 [shape = 'u8[4096]{0}', space=vmem, size = 0x1000, scoped, tag = 'scoped mem for output reshape']
    #allocation1 [shape = 'u8[4096]{0}', space=vmem, size = 0x1000, scoped, tag = 'scoped mem for input reshape']
    %s3 = sshll.u32 1, 2
    %s4 = ssub.s32 %s3, 1
    %v5 = vld [vmem:[%s0] sm:%s4]
    %6 = vst [vmem:[#allocation1] sm:%s4] %v5
    %v7 = vld [vmem:[#allocation1] sm:$0x1]
    %vm8 = vcmask 64512
    %9 = vst.msk [vmem:[#allocation0] sm:$0x1] %vm8, %v7
    %s10 = scalar_lea.vmem [#allocation1], 1
    %v11 = vld [vmem:[%s10] sm:$0x1]
    %12 = vrot.lane.b32.xlu0 %v11, 8
    %v13 = vpop.permute.xlu0 %12
    %vm14 = vcmask 130112
    %15 = vst.msk [vmem:[#allocation0] sm:$0x1] %vm14, %v13
    %s17 = sshll.u32 1, 1
    %s18 = ssub.s32 %s17, 1
    %v20 = vld [vmem:[#allocation0] sm:%s18]
    %s21 = sshll.u32 1, 1
    %s22 = ssub.s32 %s21, 1
    %23 = vst [vmem:[%s1] sm:%s22] %v20

</llo_original>
